<compile_context>
chip_gen: v5e
topology: v5e:2x2
jax: 0.10.0
libtpu: 0.0.40
codegen_flags: <defaults>
</compile_context>

<pallas_src>
import functools
import math

import jax
import jax.numpy as jnp
from jax.experimental import pallas as pl
from jax.experimental.pallas import tpu as pltpu


IN_FEATURES = 28 * 28       # 784
HIDDEN = 256
OUT_FEATURES = 10
OUT_PAD = 128               # lane-aligned logits / output width
NEG_BIG = -1e30             # masks padded logit lanes out of the softmax (f32 epilogue only)
DEFAULT_TILE_B = 1024
MAX_TILE_B = 2048           # v7x: keep tile under the 32/48 MiB scoped-VMEM budget
VMEM_LIMIT_BYTES = 48 << 20  # < v7x 64 MiB physical; ample headroom on v5e/v6e (128 MiB)


def _round_up(x, m):
    return ((x + m - 1) // m) * m


def _choose_tile_b(batch, requested):
    tb = int(requested)
    # v7x megacore: guarantee >= 2 batch tiles for mid/large batches so
    # dimension_semantics=("parallel",) actually shards work across both TensorCores.
    if batch > 512:
        tb = min(tb, max(256, _round_up((batch + 1) // 2, 8)))
    tb = min(tb, MAX_TILE_B)               # respect v7x VMEM budget
    tb = min(tb, _round_up(batch, 8))      # never (much) bigger than the batch
    return max(8, _round_up(tb, 8))        # f32 sublane multiple


def _mlp_softmax_kernel(x_ref, w1_ref, b1_ref, w2_ref, b2_ref, o_ref,
                        *, batch, tile_b, mask_tail):
    # x_ref : (TB, 784) f32  (cast to bf16 here; no wrapper pad/cast pass)
    # w1_ref: (784, 256) bf16    b1_ref: (1, 256) f32
    # w2_ref: (256, 128) bf16    b2_ref: (1, 128) f32 (padded lanes = -1e30)
    # o_ref : (TB, 128) f32
    x = x_ref[...].astype(w1_ref.dtype)
    if mask_tail:
        # cdiv grid: rows of the final partial tile read undefined HBM; zero them.
        # (Their output rows are dropped at writeback; this just keeps math NaN-free.)
        row = (pl.program_id(0) * tile_b
               + jax.lax.broadcasted_iota(jnp.int32, (tile_b, 1), 0))
        x = jnp.where(row < batch, x, 0)

    # Linear 1 (MXU, bf16 operands, f32 accumulation) + bias + ReLU in f32.
    h = jnp.dot(x, w1_ref[...], preferred_element_type=jnp.float32)
    h = jnp.maximum(h + b1_ref[...], 0.0)

    # Linear 2: bf16 operand only for the matmul; accumulate in f32, add bias.
    logits = jnp.dot(h.astype(w2_ref.dtype), w2_ref[...],
                     preferred_element_type=jnp.float32) + b2_ref[...]

    # Numerically stable softmax over the 128-wide (padded) lane dim — all f32.
    # Padded lanes carry -1e30 so exp() underflows to exactly 0 there.
    m = jnp.max(logits, axis=1, keepdims=True)
    e = jnp.exp(logits - m)
    s = jnp.sum(e, axis=1, keepdims=True)
    o_ref[...] = (e / s).astype(o_ref.dtype)   # exact normalization (off critical path)


def prepare_params(w1, b1, w2, b2):
    """One-time prep: cast weights to bf16; pad only the output dim 10 -> 128.

    w1: (784, 256)  b1: (256,)  w2: (256, 10)  b2: (10,)
    No HBM-level K padding — Mosaic pads lanes in VMEM for free.
    """
    w1p = w1.astype(jnp.bfloat16)                                   # (784, 256)
    b1p = b1.reshape(1, HIDDEN).astype(jnp.float32)

    w2p = jnp.zeros((HIDDEN, OUT_PAD), jnp.bfloat16)
    w2p = w2p.at[:, :OUT_FEATURES].set(w2.astype(jnp.bfloat16))
    b2p = jnp.full((1, OUT_PAD), NEG_BIG, jnp.float32)
    b2p = b2p.at[0, :OUT_FEATURES].set(b2.astype(jnp.float32))
    return w1p, b1p, w2p, b2p


@functools.partial(jax.jit, static_argnames=("tile_b",))
def feed_forward_net(x_nchw, params, *, tile_b=DEFAULT_TILE_B):
    """Forward pass. x_nchw: (B, 1, 28, 28) f32; params from prepare_params().

    Returns (B, 10) softmax probabilities (f32).
    """
    w1p, b1p, w2p, b2p = params
    B = x_nchw.shape[0]

    # nn.Flatten(): row-major flatten of everything but batch (free reshape, same as torch).
    x = x_nchw.reshape(B, -1)
    assert x.shape[1] == IN_FEATURES

    tb = _choose_tile_b(B, tile_b)
    grid = (pl.cdiv(B, tb),)
    mask_tail = (B % tb) != 0

    kernel = functools.partial(_mlp_softmax_kernel,
                               batch=B, tile_b=tb, mask_tail=mask_tail)

    out = pl.pallas_call(
        kernel,
        out_shape=jax.ShapeDtypeStruct((B, OUT_PAD), jnp.float32),
        grid=grid,
        in_specs=[
            # x streamed per batch tile directly as f32; 784 == full last dim, so the
            # (8,128) divisibility rule does not apply to this block shape.
            pl.BlockSpec((tb, IN_FEATURES), lambda i: (i, 0)),
            pl.BlockSpec((IN_FEATURES, HIDDEN), lambda i: (0, 0)),   # W1: VMEM-resident
            pl.BlockSpec((1, HIDDEN), lambda i: (0, 0)),             # b1: VMEM-resident
            pl.BlockSpec((HIDDEN, OUT_PAD), lambda i: (0, 0)),       # W2: VMEM-resident
            pl.BlockSpec((1, OUT_PAD), lambda i: (0, 0)),            # b2: VMEM-resident
        ],
        out_specs=pl.BlockSpec((tb, OUT_PAD), lambda i: (i, 0)),
        compiler_params=pltpu.CompilerParams(
            dimension_semantics=("parallel",),   # shard batch tiles across TCs (v7x)
            vmem_limit_bytes=VMEM_LIMIT_BYTES,
        ),
    )(x, w1p, b1p, w2p, b2p)

    # Drop the padded logit lanes (fused under this jit — no extra dispatch).
    return out[:, :OUT_FEATURES]


def init_params(key):
    """nn.Linear default init: U(-1/sqrt(fan_in), 1/sqrt(fan_in)). Weights stored (in, out)."""
    k1, k2, k3, k4 = jax.random.split(key, 4)
    bound1 = 1.0 / math.sqrt(IN_FEATURES)
    bound2 = 1.0 / math.sqrt(HIDDEN)
    w1 = jax.random.uniform(k1, (IN_FEATURES, HIDDEN), jnp.float32, -bound1, bound1)
    b1 = jax.random.uniform(k2, (HIDDEN,), jnp.float32, -bound1, bound1)
    w2 = jax.random.uniform(k3, (HIDDEN, OUT_FEATURES), jnp.float32, -bound2, bound2)
    b2 = jax.random.uniform(k4, (OUT_FEATURES,), jnp.float32, -bound2, bound2)
    return w1, b1, w2, b2


if __name__ == "__main__":
    key = jax.random.PRNGKey(0)
    k_x, k_p = jax.random.split(key)

    B = 8
    x = jax.random.normal(k_x, (B, 1, 28, 28), dtype=jnp.float32)  # NCHW like MNIST
    w1, b1, w2, b2 = init_params(k_p)

    params = prepare_params(w1, b1, w2, b2)          # one-time prep (weight casts/pads)
    probs = feed_forward_net(x, params)
    probs = jax.block_until_ready(probs)

    assert probs.shape == (B, OUT_FEATURES)

    # Reference matching the kernel's precision (bf16 matmul operands, f32 accumulation).
    xf = x.reshape(B, -1)
    h_ref = jnp.maximum(
        jnp.dot(xf.astype(jnp.bfloat16), w1.astype(jnp.bfloat16),
                preferred_element_type=jnp.float32) + b1, 0.0)
    logits_ref = jnp.dot(h_ref.astype(jnp.bfloat16), w2.astype(jnp.bfloat16),
                         preferred_element_type=jnp.float32) + b2
    ref_bf16 = jax.nn.softmax(logits_ref, axis=1)
    assert jnp.allclose(probs, ref_bf16, atol=3e-3, rtol=0.0)

    # Loose check against the pure-f32 PyTorch-equivalent forward.
    ref_f32 = jax.nn.softmax(jnp.maximum(xf @ w1 + b1, 0.0) @ w2 + b2, axis=1)
    assert jnp.allclose(probs, ref_f32, atol=3e-2, rtol=0.0)

    # Softmax rows sum to 1 (exact division in the epilogue).
    assert jnp.allclose(jnp.sum(probs, axis=1), 1.0, atol=1e-5)

    print("KERNEL_OK")
</pallas_src>

<mosaic_0001>
module attributes {stable_mosaic.version = 11 : i64} {
  func.func @_mlp_softmax_kernel(%arg0: i32, %arg1: memref<8x784xf32, #tpu.memory_space<vmem>>, %arg2: memref<784x256xbf16, #tpu.memory_space<vmem>>, %arg3: memref<1x256xf32, #tpu.memory_space<vmem>>, %arg4: memref<256x128xbf16, #tpu.memory_space<vmem>>, %arg5: memref<1x128xf32, #tpu.memory_space<vmem>>, %arg6: memref<8x128xf32, #tpu.memory_space<vmem>>) attributes {dimension_semantics = [#tpu.dimension_semantics<parallel>], iteration_bounds = array<i64: 1>, scalar_prefetch = 0 : i64, scratch_operands = 0 : i64, tpu.core_type = #tpu.core_type<tc>, window_params = [{transform_indices = @transform_0, window_bounds = array<i64: 8, 784>}, {pipeline_mode = #tpu.pipeline_mode<synchronous>, transform_indices = @transform_1, window_bounds = array<i64: 784, 256>}, {pipeline_mode = #tpu.pipeline_mode<synchronous>, transform_indices = @transform_2, window_bounds = array<i64: 1, 256>}, {pipeline_mode = #tpu.pipeline_mode<synchronous>, transform_indices = @transform_3, window_bounds = array<i64: 256, 128>}, {pipeline_mode = #tpu.pipeline_mode<synchronous>, transform_indices = @transform_4, window_bounds = array<i64: 1, 128>}, {transform_indices = @transform_5, window_bounds = array<i64: 8, 128>}]} {
    %c0 = arith.constant 0 : index
    %c0_0 = arith.constant 0 : index
    %0 = vector.load %arg1[%c0, %c0_0] : memref<8x784xf32, #tpu.memory_space<vmem>>, vector<8x784xf32>
    %1 = arith.truncf %0 : vector<8x784xf32> to vector<8x784xbf16>
    %c0_1 = arith.constant 0 : index
    %c0_2 = arith.constant 0 : index
    %2 = vector.load %arg2[%c0_1, %c0_2] : memref<784x256xbf16, #tpu.memory_space<vmem>>, vector<784x256xbf16>
    %cst = arith.constant dense<0.000000e+00> : vector<8x256xf32>
    %3 = tpu.matmul %1, %2, %cst {dimension_numbers = #tpu.dot_dimension_numbers<[1], [0], [0], [1], [0, 0, 1, 1], [], []>} : vector<8x784xbf16>, vector<784x256xbf16>, vector<8x256xf32> -> vector<8x256xf32>
    %c0_3 = arith.constant 0 : index
    %c0_4 = arith.constant 0 : index
    %4 = vector.load %arg3[%c0_3, %c0_4] : memref<1x256xf32, #tpu.memory_space<vmem>>, vector<1x256xf32>
    %5 = vector.broadcast %4 : vector<1x256xf32> to vector<8x256xf32>
    %6 = arith.addf %3, %5 : vector<8x256xf32>
    %cst_5 = arith.constant 0.000000e+00 : f32
    %7 = vector.broadcast %cst_5 : f32 to vector<8x256xf32>
    %8 = arith.maximumf %6, %7 : vector<8x256xf32>
    %9 = arith.truncf %8 : vector<8x256xf32> to vector<8x256xbf16>
    %c0_6 = arith.constant 0 : index
    %c0_7 = arith.constant 0 : index
    %10 = vector.load %arg4[%c0_6, %c0_7] : memref<256x128xbf16, #tpu.memory_space<vmem>>, vector<256x128xbf16>
    %cst_8 = arith.constant dense<0.000000e+00> : vector<8x128xf32>
    %11 = tpu.matmul %9, %10, %cst_8 {dimension_numbers = #tpu.dot_dimension_numbers<[1], [0], [0], [1], [0, 0, 1, 1], [], []>} : vector<8x256xbf16>, vector<256x128xbf16>, vector<8x128xf32> -> vector<8x128xf32>
    %c0_9 = arith.constant 0 : index
    %c0_10 = arith.constant 0 : index
    %12 = vector.load %arg5[%c0_9, %c0_10] : memref<1x128xf32, #tpu.memory_space<vmem>>, vector<1x128xf32>
    %13 = vector.broadcast %12 : vector<1x128xf32> to vector<8x128xf32>
    %14 = arith.addf %11, %13 : vector<8x128xf32>
    %cst_11 = arith.constant dense<0xFF800000> : vector<8xf32>
    %15 = vector.multi_reduction <maximumf>, %14, %cst_11 [1] : vector<8x128xf32> to vector<8xf32>
    %16 = vector.shape_cast %15 : vector<8xf32> to vector<8x1xf32>
    %17 = vector.broadcast %16 : vector<8x1xf32> to vector<8x128xf32>
    %18 = arith.subf %14, %17 : vector<8x128xf32>
    %19 = math.exp %18 : vector<8x128xf32>
    %cst_12 = arith.constant dense<0.000000e+00> : vector<8xf32>
    %20 = vector.multi_reduction <add>, %19, %cst_12 [1] : vector<8x128xf32> to vector<8xf32>
    %21 = vector.shape_cast %20 : vector<8xf32> to vector<8x1xf32>
    %22 = vector.broadcast %21 : vector<8x1xf32> to vector<8x128xf32>
    %23 = arith.divf %19, %22 : vector<8x128xf32>
    %c0_13 = arith.constant 0 : index
    %c0_14 = arith.constant 0 : index
    %24 = vector.load %arg6[%c0_13, %c0_14] : memref<8x128xf32, #tpu.memory_space<vmem>>, vector<8x128xf32>
    tpu.vector_store %arg6[%c0_13, %c0_14], %23 {strides = array<i32>} : memref<8x128xf32, #tpu.memory_space<vmem>>, vector<8x128xf32>,
    return
  }
  func.func @transform_0(%arg0: i32) -> (i32, i32) {
    %c0_i32 = arith.constant 0 : i32
    %c0_i32_0 = arith.constant 0 : i32
    return %arg0, %c0_i32 : i32, i32
  }
  func.func @transform_1(%arg0: i32) -> (i32, i32) {
    %c0_i32 = arith.constant 0 : i32
    %c0_i32_0 = arith.constant 0 : i32
    %c0_i32_1 = arith.constant 0 : i32
    return %c0_i32, %c0_i32_0 : i32, i32
  }
  func.func @transform_2(%arg0: i32) -> (i32, i32) {
    %c0_i32 = arith.constant 0 : i32
    %c0_i32_0 = arith.constant 0 : i32
    %c0_i32_1 = arith.constant 0 : i32
    return %c0_i32, %c0_i32_0 : i32, i32
  }
  func.func @transform_3(%arg0: i32) -> (i32, i32) {
    %c0_i32 = arith.constant 0 : i32
    %c0_i32_0 = arith.constant 0 : i32
    %c0_i32_1 = arith.constant 0 : i32
    return %c0_i32, %c0_i32_0 : i32, i32
  }
  func.func @transform_4(%arg0: i32) -> (i32, i32) {
    %c0_i32 = arith.constant 0 : i32
    %c0_i32_0 = arith.constant 0 : i32
    %c0_i32_1 = arith.constant 0 : i32
    return %c0_i32, %c0_i32_0 : i32, i32
  }
  func.func @transform_5(%arg0: i32) -> (i32, i32) {
    %c0_i32 = arith.constant 0 : i32
    %c0_i32_0 = arith.constant 0 : i32
    return %arg0, %c0_i32 : i32, i32
  }
}

</mosaic_0001>

<llo_original>
// kernel: feed_forward_net.1
$region0: #{feed_forward_net.1}
  #allocation0 [shape = 'u32[]', space=smem, size = 0x4, offset = 0x4, fixed_abs, tag = 'smem constant byte address 0x4 - core index']
  #allocation1 [shape = 'u32[72,128]{1,0:T(1,128)}', space=vmem, size = 0x9000, scoped, tag = 'internal scratch']
  %s0 = inlined_call_operand.vmem [shape: f32[8,784], index: 0, kind: input, shape index: {}]
  %s1 = inlined_call_operand.vmem [shape: bf16[784,256], index: 1, kind: input, shape index: {}]
  %s2 = inlined_call_operand.vmem [shape: f32[1,256], index: 2, kind: input, shape index: {}]
  %s3 = inlined_call_operand.hbm [shape: bf16[256,128], index: 3, kind: input, shape index: {}]
  %s4 = inlined_call_operand.vmem [shape: f32[1,128], index: 4, kind: input, shape index: {}]
  %s5 = inlined_call_operand.hbm [shape: f32[8,128], index: 5, kind: output, shape index: {}]
  %s6 = sld [smem:[#allocation0]]
  $region34: #{feed_forward_net.1} parent=0
    _
  %s8 = ssub.s32 1, %s6
  %s9 = scalar_select 0, %s8, %s6
  $region1: #{feed_forward_net.1} parent=0
    #allocation2 [shape = 'u8[65536]{0}', space=vmem, size = 0x10000, scoped, tag = 'input window, operand 3, single buffered']
    #allocation3 [shape = 's32[1]{0}', space=sflag, size = 0x4, scoped, tag = 'scoped memory for feed_forward_net.1']
    #allocation4 [shape = 's32[1]{0}', space=sflag, size = 0x4, scoped, tag = 'scoped memory for feed_forward_net.1']
    #allocation5 [shape = 'u8[4096]{0}', space=vmem, size = 0x1000, scoped, tag = 'output window, operand 0, single buffered']
    %10 = vsyncpa [#allocation3], 0
    %11 = vsyncpa [#allocation4], 0
    // Predicated region
    $region2: #{feed_forward_net.1} parent=1 // pred_check
      _
    $region3: #{feed_forward_net.1} parent=1 // pred_check_branch
      %13 = sbr.rel (0) target = $region5
    $region4: #{feed_forward_net.1} parent=1 // pred_region
      _
    $region5: #{feed_forward_net.1} parent=1 // pred_fallthru
      _
    // Predicated region
    $region6: #{feed_forward_net.1} parent=1 // pred_check
      _
    $region7: #{feed_forward_net.1} parent=1 // pred_check_branch
      %15 = sbr.rel (0) target = $region9
    $region8: #{feed_forward_net.1} parent=1 // pred_region
      _
    $region9: #{feed_forward_net.1} parent=1 // pred_fallthru
      _
    // Predicated region
    $region10: #{feed_forward_net.1} parent=1 // pred_check
      _
    $region11: #{feed_forward_net.1} parent=1 // pred_check_branch
      %17 = sbr.rel (0) target = $region13
    $region12: #{feed_forward_net.1} parent=1 // pred_region
      _
    $region13: #{feed_forward_net.1} parent=1 // pred_fallthru
      _
    // Predicated region
    $region14: #{feed_forward_net.1} parent=1 // pred_check
      _
    $region15: #{feed_forward_net.1} parent=1 // pred_check_branch
      %19 = sbr.rel (0) target = $region17
    $region16: #{feed_forward_net.1} parent=1 // pred_region
      %21 = vsyncadd [#allocation3], 0
      %s22 = sshll.u32 %s3, 4
      %s23 = int_to_ptr.hbm [resolvable:$true] %s22
      %s24 = sshll.u32 [#allocation2], 4
      %s25 = int_to_ptr.vmem [resolvable:$true] %s24
      %30 = dma.hbm_to_vmem [thread:$0]  %s23, 2048, %s25, [#allocation3], 64, 64, 4
    $region17: #{feed_forward_net.1} parent=1 // pred_fallthru
      _
    // Predicated region
    $region18: #{feed_forward_net.1} parent=1 // pred_check
      _
    $region19: #{feed_forward_net.1} parent=1 // pred_check_branch
      %32 = sbr.rel (0) target = $region21
    $region20: #{feed_forward_net.1} parent=1 // pred_region
      _
    $region21: #{feed_forward_net.1} parent=1 // pred_fallthru
      _
    // Predicated region
    $region22: #{feed_forward_net.1} parent=1 // pred_check
      _
    $region23: #{feed_forward_net.1} parent=1 // pred_check_branch
      %34 = sbr.rel (0) target = $region25
    $region24: #{feed_forward_net.1} parent=1 // pred_region
      %36 = dma.done [#allocation3], 2048
    $region25: #{feed_forward_net.1} parent=1 // pred_fallthru
      _
    %v38 = vld [vmem:[%s0] sm:$0xff]
    %v39 = vld [vmem:[%s0 + $0x8] sm:$0xff]
    %v40 = vld [vmem:[%s0 + $0x10] sm:$0xff]
    %v41 = vld [vmem:[%s0 + $0x18] sm:$0xff]
    %v42 = vld [vmem:[%s0 + $0x20] sm:$0xff]
    %v43 = vld [vmem:[%s0 + $0x28] sm:$0xff]
    %v44 = vld [vmem:[%s0 + $0x30] sm:$0xff]
    %v45 = vpack.c.bf16 %v38, %v38
    %v46 = vpack.c.bf16 %v39, %v39
    %v47 = vpack.c.bf16 %v40, %v40
    %v48 = vpack.c.bf16 %v41, %v41
    %v49 = vpack.c.bf16 %v42, %v42
    %v50 = vpack.c.bf16 %v43, %v43
    %v51 = vpack.c.bf16 %v44, %v44
    %v52 = vld [vmem:[%s1] sm:$0xff]
    %v53 = vld [vmem:[%s1 + $0x8] sm:$0xff]
    %v54 = vld [vmem:[%s1 + $0x10] sm:$0xff]
    %v55 = vld [vmem:[%s1 + $0x18] sm:$0xff]
    %v56 = vld [vmem:[%s1 + $0x20] sm:$0xff]
    %v57 = vld [vmem:[%s1 + $0x28] sm:$0xff]
    %v58 = vld [vmem:[%s1 + $0x30] sm:$0xff]
    %v59 = vld [vmem:[%s1 + $0x38] sm:$0xff]
    %v60 = vld [vmem:[%s1 + $0x40] sm:$0xff]
    %v61 = vld [vmem:[%s1 + $0x48] sm:$0xff]
    %v62 = vld [vmem:[%s1 + $0x50] sm:$0xff]
    %v63 = vld [vmem:[%s1 + $0x58] sm:$0xff]
    %v64 = vld [vmem:[%s1 + $0x60] sm:$0xff]
    %v65 = vld [vmem:[%s1 + $0x68] sm:$0xff]
    %v66 = vld [vmem:[%s1 + $0x70] sm:$0xff]
    %v67 = vld [vmem:[%s1 + $0x78] sm:$0xff]
    %v68 = vld [vmem:[%s1 + $0x80] sm:$0xff]
    %v69 = vld [vmem:[%s1 + $0x88] sm:$0xff]
    %v70 = vld [vmem:[%s1 + $0x90] sm:$0xff]
    %v71 = vld [vmem:[%s1 + $0x98] sm:$0xff]
    %v72 = vld [vmem:[%s1 + $0xa0] sm:$0xff]
    %v73 = vld [vmem:[%s1 + $0xa8] sm:$0xff]
    %v74 = vld [vmem:[%s1 + $0xb0] sm:$0xff]
    %v75 = vld [vmem:[%s1 + $0xb8] sm:$0xff]
    %v76 = vld [vmem:[%s1 + $0xc0] sm:$0xff]
    %v77 = vld [vmem:[%s1 + $0xc8] sm:$0xff]
    %v78 = vld [vmem:[%s1 + $0xd0] sm:$0xff]
    %v79 = vld [vmem:[%s1 + $0xd8] sm:$0xff]
    %v80 = vld [vmem:[%s1 + $0xe0] sm:$0xff]
    %v81 = vld [vmem:[%s1 + $0xe8] sm:$0xff]
    %v82 = vld [vmem:[%s1 + $0xf0] sm:$0xff]
    %v83 = vld [vmem:[%s1 + $0xf8] sm:$0xff]
    %v84 = vld [vmem:[%s1 + $0x100] sm:$0xff]
    %v85 = vld [vmem:[%s1 + $0x108] sm:$0xff]
    %v86 = vld [vmem:[%s1 + $0x110] sm:$0xff]
    %v87 = vld [vmem:[%s1 + $0x118] sm:$0xff]
    %v88 = vld [vmem:[%s1 + $0x120] sm:$0xff]
    %v89 = vld [vmem:[%s1 + $0x128] sm:$0xff]
    %v90 = vld [vmem:[%s1 + $0x130] sm:$0xff]
    %v91 = vld [vmem:[%s1 + $0x138] sm:$0xff]
    %v92 = vld [vmem:[%s1 + $0x140] sm:$0xff]
    %v93 = vld [vmem:[%s1 + $0x148] sm:$0xff]
    %v94 = vld [vmem:[%s1 + $0x150] sm:$0xff]
    %v95 = vld [vmem:[%s1 + $0x158] sm:$0xff]
    %v96 = vld [vmem:[%s1 + $0x160] sm:$0xff]
    %v97 = vld [vmem:[%s1 + $0x168] sm:$0xff]
    %v98 = vld [vmem:[%s1 + $0x170] sm:$0xff]
    %v99 = vld [vmem:[%s1 + $0x178] sm:$0xff]
    %v100 = vld [vmem:[%s1 + $0x180] sm:$0xff]
    %v101 = vld [vmem:[%s1 + $0x188] sm:$0xff]
    %v102 = vld [vmem:[%s1 + $0x190] sm:$0xff]
    %v103 = vld [vmem:[%s1 + $0x198] sm:$0xff]
    %v104 = vld [vmem:[%s1 + $0x1a0] sm:$0xff]
    %v105 = vld [vmem:[%s1 + $0x1a8] sm:$0xff]
    %v106 = vld [vmem:[%s1 + $0x1b0] sm:$0xff]
    %v107 = vld [vmem:[%s1 + $0x1b8] sm:$0xff]
    %v108 = vld [vmem:[%s1 + $0x1c0] sm:$0xff]
    %v109 = vld [vmem:[%s1 + $0x1c8] sm:$0xff]
    %v110 = vld [vmem:[%s1 + $0x1d0] sm:$0xff]
    %v111 = vld [vmem:[%s1 + $0x1d8] sm:$0xff]
    %v112 = vld [vmem:[%s1 + $0x1e0] sm:$0xff]
    %v113 = vld [vmem:[%s1 + $0x1e8] sm:$0xff]
    %v114 = vld [vmem:[%s1 + $0x1f0] sm:$0xff]
    %v115 = vld [vmem:[%s1 + $0x1f8] sm:$0xff]
    %v116 = vld [vmem:[%s1 + $0x200] sm:$0xff]
    %v117 = vld [vmem:[%s1 + $0x208] sm:$0xff]
    %v118 = vld [vmem:[%s1 + $0x210] sm:$0xff]
    %v119 = vld [vmem:[%s1 + $0x218] sm:$0xff]
    %v120 = vld [vmem:[%s1 + $0x220] sm:$0xff]
    %v121 = vld [vmem:[%s1 + $0x228] sm:$0xff]
    %v122 = vld [vmem:[%s1 + $0x230] sm:$0xff]
    %v123 = vld [vmem:[%s1 + $0x238] sm:$0xff]
    %v124 = vld [vmem:[%s1 + $0x240] sm:$0xff]
    %v125 = vld [vmem:[%s1 + $0x248] sm:$0xff]
    %v126 = vld [vmem:[%s1 + $0x250] sm:$0xff]
    %v127 = vld [vmem:[%s1 + $0x258] sm:$0xff]
    %v128 = vld [vmem:[%s1 + $0x260] sm:$0xff]
    %v129 = vld [vmem:[%s1 + $0x268] sm:$0xff]
    %v130 = vld [vmem:[%s1 + $0x270] sm:$0xff]
    %v131 = vld [vmem:[%s1 + $0x278] sm:$0xff]
    %v132 = vld [vmem:[%s1 + $0x280] sm:$0xff]
    %v133 = vld [vmem:[%s1 + $0x288] sm:$0xff]
    %v134 = vld [vmem:[%s1 + $0x290] sm:$0xff]
    %v135 = vld [vmem:[%s1 + $0x298] sm:$0xff]
    %v136 = vld [vmem:[%s1 + $0x2a0] sm:$0xff]
    %v137 = vld [vmem:[%s1 + $0x2a8] sm:$0xff]
    %v138 = vld [vmem:[%s1 + $0x2b0] sm:$0xff]
    %v139 = vld [vmem:[%s1 + $0x2b8] sm:$0xff]
    %v140 = vld [vmem:[%s1 + $0x2c0] sm:$0xff]
    %v141 = vld [vmem:[%s1 + $0x2c8] sm:$0xff]
    %v142 = vld [vmem:[%s1 + $0x2d0] sm:$0xff]
    %v143 = vld [vmem:[%s1 + $0x2d8] sm:$0xff]
    %v144 = vld [vmem:[%s1 + $0x2e0] sm:$0xff]
    %v145 = vld [vmem:[%s1 + $0x2e8] sm:$0xff]
    %v146 = vld [vmem:[%s1 + $0x2f0] sm:$0xff]
    %v147 = vld [vmem:[%s1 + $0x2f8] sm:$0xff]
    %v148 = vld [vmem:[%s1 + $0x300] sm:$0xff]
    %v149 = vld [vmem:[%s1 + $0x308] sm:$0xff]
    %v150 = vld [vmem:[%s2] sm:$0x3]
    %v152 = vperm.slane %v150, 0
    %v153 = vperm.slane %v150, 1
    %v254 = vunpack.c.l.b16 %v52
    %v255 = vunpack.c.h.b16 %v52
    %v256 = vunpack.c.l.b16 %v53
    %v257 = vunpack.c.h.b16 %v53
    %v258 = vunpack.c.l.b16 %v54
    %v259 = vunpack.c.h.b16 %v54
    %v260 = vunpack.c.l.b16 %v55
    %v261 = vunpack.c.h.b16 %v55
    %v262 = vunpack.c.l.b16 %v56
    %v263 = vunpack.c.h.b16 %v56
    %v264 = vunpack.c.l.b16 %v57
    %v265 = vunpack.c.h.b16 %v57
    %v266 = vunpack.c.l.b16 %v58
    %v267 = vunpack.c.h.b16 %v58
    %v268 = vunpack.c.l.b16 %v59
    %v269 = vunpack.c.h.b16 %v59
    %v270 = vunpack.c.l.b16 %v60
    %v271 = vunpack.c.h.b16 %v60
    %v272 = vunpack.c.l.b16 %v61
    %v273 = vunpack.c.h.b16 %v61
    %v274 = vunpack.c.l.b16 %v62
    %v275 = vunpack.c.h.b16 %v62
    %v276 = vunpack.c.l.b16 %v63
    %v277 = vunpack.c.h.b16 %v63
    %v278 = vunpack.c.l.b16 %v64
    %v279 = vunpack.c.h.b16 %v64
    %v280 = vunpack.c.l.b16 %v65
    %v281 = vunpack.c.h.b16 %v65
    %v282 = vunpack.c.l.b16 %v66
    %v283 = vunpack.c.h.b16 %v66
    %v284 = vunpack.c.l.b16 %v67
    %v285 = vunpack.c.h.b16 %v67
    %v286 = vunpack.c.l.b16 %v68
    %v287 = vunpack.c.h.b16 %v68
    %v288 = vunpack.c.l.b16 %v69
    %v289 = vunpack.c.h.b16 %v69
    %v290 = vunpack.c.l.b16 %v70
    %v291 = vunpack.c.h.b16 %v70
    %v292 = vunpack.c.l.b16 %v71
    %v293 = vunpack.c.h.b16 %v71
    %v294 = vunpack.c.l.b16 %v72
    %v295 = vunpack.c.h.b16 %v72
    %v296 = vunpack.c.l.b16 %v73
    %v297 = vunpack.c.h.b16 %v73
    %v298 = vunpack.c.l.b16 %v74
    %v299 = vunpack.c.h.b16 %v74
    %v300 = vunpack.c.l.b16 %v75
    %v301 = vunpack.c.h.b16 %v75
    %v302 = vunpack.c.l.b16 %v76
    %v303 = vunpack.c.h.b16 %v76
    %v304 = vunpack.c.l.b16 %v77
    %v305 = vunpack.c.h.b16 %v77
    %v306 = vunpack.c.l.b16 %v78
    %v307 = vunpack.c.h.b16 %v78
    %v308 = vunpack.c.l.b16 %v79
    %v309 = vunpack.c.h.b16 %v79
    %v310 = vunpack.c.l.b16 %v80
    %v311 = vunpack.c.h.b16 %v80
    %v312 = vunpack.c.l.b16 %v81
    %v313 = vunpack.c.h.b16 %v81
    %v314 = vunpack.c.l.b16 %v82
    %v315 = vunpack.c.h.b16 %v82
    %v316 = vunpack.c.l.b16 %v83
    %v317 = vunpack.c.h.b16 %v83
    %v318 = vunpack.c.l.b16 %v84
    %v319 = vunpack.c.h.b16 %v84
    %v320 = vunpack.c.l.b16 %v85
    %v321 = vunpack.c.h.b16 %v85
    %v322 = vunpack.c.l.b16 %v86
    %v323 = vunpack.c.h.b16 %v86
    %v324 = vunpack.c.l.b16 %v87
    %v325 = vunpack.c.h.b16 %v87
    %v326 = vunpack.c.l.b16 %v88
    %v327 = vunpack.c.h.b16 %v88
    %v328 = vunpack.c.l.b16 %v89
    %v329 = vunpack.c.h.b16 %v89
    %v330 = vunpack.c.l.b16 %v90
    %v331 = vunpack.c.h.b16 %v90
    %v332 = vunpack.c.l.b16 %v91
    %v333 = vunpack.c.h.b16 %v91
    %v334 = vunpack.c.l.b16 %v92
    %v335 = vunpack.c.h.b16 %v92
    %v336 = vunpack.c.l.b16 %v93
    %v337 = vunpack.c.h.b16 %v93
    %v338 = vunpack.c.l.b16 %v94
    %v339 = vunpack.c.h.b16 %v94
    %v340 = vunpack.c.l.b16 %v95
    %v341 = vunpack.c.h.b16 %v95
    %v342 = vunpack.c.l.b16 %v96
    %v343 = vunpack.c.h.b16 %v96
    %v344 = vunpack.c.l.b16 %v97
    %v345 = vunpack.c.h.b16 %v97
    %v346 = vunpack.c.l.b16 %v98
    %v347 = vunpack.c.h.b16 %v98
    %v348 = vunpack.c.l.b16 %v99
    %v349 = vunpack.c.h.b16 %v99
    %v350 = vunpack.c.l.b16 %v100
    %v351 = vunpack.c.h.b16 %v100
    %v352 = vunpack.c.l.b16 %v101
    %v353 = vunpack.c.h.b16 %v101
    %v354 = vunpack.c.l.b16 %v102
    %v355 = vunpack.c.h.b16 %v102
    %v356 = vunpack.c.l.b16 %v103
    %v357 = vunpack.c.h.b16 %v103
    %v358 = vunpack.c.l.b16 %v104
    %v359 = vunpack.c.h.b16 %v104
    %v360 = vunpack.c.l.b16 %v105
    %v361 = vunpack.c.h.b16 %v105
    %v362 = vunpack.c.l.b16 %v106
    %v363 = vunpack.c.h.b16 %v106
    %v364 = vunpack.c.l.b16 %v107
    %v365 = vunpack.c.h.b16 %v107
    %v366 = vunpack.c.l.b16 %v108
    %v367 = vunpack.c.h.b16 %v108
    %v368 = vunpack.c.l.b16 %v109
    %v369 = vunpack.c.h.b16 %v109
    %v370 = vunpack.c.l.b16 %v110
    %v371 = vunpack.c.h.b16 %v110
    %v372 = vunpack.c.l.b16 %v111
    %v373 = vunpack.c.h.b16 %v111
    %v374 = vunpack.c.l.b16 %v112
    %v375 = vunpack.c.h.b16 %v112
    %v376 = vunpack.c.l.b16 %v113
    %v377 = vunpack.c.h.b16 %v113
    %v378 = vunpack.c.l.b16 %v114
    %v379 = vunpack.c.h.b16 %v114
    %v380 = vunpack.c.l.b16 %v115
    %v381 = vunpack.c.h.b16 %v115
    %v382 = vunpack.c.l.b16 %v116
    %v383 = vunpack.c.h.b16 %v116
    %v384 = vunpack.c.l.b16 %v117
    %v385 = vunpack.c.h.b16 %v117
    %v386 = vunpack.c.l.b16 %v118
    %v387 = vunpack.c.h.b16 %v118
    %v388 = vunpack.c.l.b16 %v119
    %v389 = vunpack.c.h.b16 %v119
    %v390 = vunpack.c.l.b16 %v120
    %v391 = vunpack.c.h.b16 %v120
    %v392 = vunpack.c.l.b16 %v121
    %v393 = vunpack.c.h.b16 %v121
    %v394 = vunpack.c.l.b16 %v122
    %v395 = vunpack.c.h.b16 %v122
    %v396 = vunpack.c.l.b16 %v123
    %v397 = vunpack.c.h.b16 %v123
    %v398 = vunpack.c.l.b16 %v124
    %v399 = vunpack.c.h.b16 %v124
    %v400 = vunpack.c.l.b16 %v125
    %v401 = vunpack.c.h.b16 %v125
    %v402 = vunpack.c.l.b16 %v126
    %v403 = vunpack.c.h.b16 %v126
    %v404 = vunpack.c.l.b16 %v127
    %v405 = vunpack.c.h.b16 %v127
    %v406 = vunpack.c.l.b16 %v128
    %v407 = vunpack.c.h.b16 %v128
    %v408 = vunpack.c.l.b16 %v129
    %v409 = vunpack.c.h.b16 %v129
    %v410 = vunpack.c.l.b16 %v130
    %v411 = vunpack.c.h.b16 %v130
    %v412 = vunpack.c.l.b16 %v131
    %v413 = vunpack.c.h.b16 %v131
    %v414 = vunpack.c.l.b16 %v132
    %v415 = vunpack.c.h.b16 %v132
    %v416 = vunpack.c.l.b16 %v133
    %v417 = vunpack.c.h.b16 %v133
    %v418 = vunpack.c.l.b16 %v134
    %v419 = vunpack.c.h.b16 %v134
    %v420 = vunpack.c.l.b16 %v135
    %v421 = vunpack.c.h.b16 %v135
    %v422 = vunpack.c.l.b16 %v136
    %v423 = vunpack.c.h.b16 %v136
    %v424 = vunpack.c.l.b16 %v137
    %v425 = vunpack.c.h.b16 %v137
    %v426 = vunpack.c.l.b16 %v138
    %v427 = vunpack.c.h.b16 %v138
    %v428 = vunpack.c.l.b16 %v139
    %v429 = vunpack.c.h.b16 %v139
    %v430 = vunpack.c.l.b16 %v140
    %v431 = vunpack.c.h.b16 %v140
    %v432 = vunpack.c.l.b16 %v141
    %v433 = vunpack.c.h.b16 %v141
    %v434 = vunpack.c.l.b16 %v142
    %v435 = vunpack.c.h.b16 %v142
    %v436 = vunpack.c.l.b16 %v143
    %v437 = vunpack.c.h.b16 %v143
    %v438 = vunpack.c.l.b16 %v144
    %v439 = vunpack.c.h.b16 %v144
    %v440 = vunpack.c.l.b16 %v145
    %v441 = vunpack.c.h.b16 %v145
    %v442 = vunpack.c.l.b16 %v146
    %v443 = vunpack.c.h.b16 %v146
    %v444 = vunpack.c.l.b16 %v147
    %v445 = vunpack.c.h.b16 %v147
    %v446 = vunpack.c.l.b16 %v148
    %v447 = vunpack.c.h.b16 %v148
    %v448 = vunpack.c.l.b16 %v149
    %v449 = vunpack.c.h.b16 %v149
    %v450 = vpack.c.b16 %v256, %v254
    %v451 = vpack.c.b16 %v257, %v255
    %v452 = vpack.c.b16 %v260, %v258
    %v453 = vpack.c.b16 %v261, %v259
    %v454 = vpack.c.b16 %v264, %v262
    %v455 = vpack.c.b16 %v265, %v263
    %v456 = vpack.c.b16 %v268, %v266
    %v457 = vpack.c.b16 %v269, %v267
    %v458 = vpack.c.b16 %v272, %v270
    %v459 = vpack.c.b16 %v273, %v271
    %v460 = vpack.c.b16 %v276, %v274
    %v461 = vpack.c.b16 %v277, %v275
    %v462 = vpack.c.b16 %v280, %v278
    %v463 = vpack.c.b16 %v281, %v279
    %v464 = vpack.c.b16 %v284, %v282
    %v465 = vpack.c.b16 %v285, %v283
    %v466 = vpack.c.b16 %v288, %v286
    %v467 = vpack.c.b16 %v289, %v287
    %v468 = vpack.c.b16 %v292, %v290
    %v469 = vpack.c.b16 %v293, %v291
    %v470 = vpack.c.b16 %v296, %v294
    %v471 = vpack.c.b16 %v297, %v295
    %v472 = vpack.c.b16 %v300, %v298
    %v473 = vpack.c.b16 %v301, %v299
    %v474 = vpack.c.b16 %v304, %v302
    %v475 = vpack.c.b16 %v305, %v303
    %v476 = vpack.c.b16 %v308, %v306
    %v477 = vpack.c.b16 %v309, %v307
    %v478 = vpack.c.b16 %v312, %v310
    %v479 = vpack.c.b16 %v313, %v311
    %v480 = vpack.c.b16 %v316, %v314
    %v481 = vpack.c.b16 %v317, %v315
    %v482 = vpack.c.b16 %v320, %v318
    %v483 = vpack.c.b16 %v321, %v319
    %v484 = vpack.c.b16 %v324, %v322
    %v485 = vpack.c.b16 %v325, %v323
    %v486 = vpack.c.b16 %v328, %v326
    %v487 = vpack.c.b16 %v329, %v327
    %v488 = vpack.c.b16 %v332, %v330
    %v489 = vpack.c.b16 %v333, %v331
    %v490 = vpack.c.b16 %v336, %v334
    %v491 = vpack.c.b16 %v337, %v335
    %v492 = vpack.c.b16 %v340, %v338
    %v493 = vpack.c.b16 %v341, %v339
    %v494 = vpack.c.b16 %v344, %v342
    %v495 = vpack.c.b16 %v345, %v343
    %v496 = vpack.c.b16 %v348, %v346
    %v497 = vpack.c.b16 %v349, %v347
    %v498 = vpack.c.b16 %v352, %v350
    %v499 = vpack.c.b16 %v353, %v351
    %v500 = vpack.c.b16 %v356, %v354
    %v501 = vpack.c.b16 %v357, %v355
    %v502 = vpack.c.b16 %v360, %v358
    %v503 = vpack.c.b16 %v361, %v359
    %v504 = vpack.c.b16 %v364, %v362
    %v505 = vpack.c.b16 %v365, %v363
    %v506 = vpack.c.b16 %v368, %v366
    %v507 = vpack.c.b16 %v369, %v367
    %v508 = vpack.c.b16 %v372, %v370
    %v509 = vpack.c.b16 %v373, %v371
    %v510 = vpack.c.b16 %v376, %v374
    %v511 = vpack.c.b16 %v377, %v375
    %v512 = vpack.c.b16 %v380, %v378
    %v513 = vpack.c.b16 %v381, %v379
    %v514 = vpack.c.b16 %v384, %v382
    %v515 = vpack.c.b16 %v385, %v383
    %v516 = vpack.c.b16 %v388, %v386
    %v517 = vpack.c.b16 %v389, %v387
    %v518 = vpack.c.b16 %v392, %v390
    %v519 = vpack.c.b16 %v393, %v391
    %v520 = vpack.c.b16 %v396, %v394
    %v521 = vpack.c.b16 %v397, %v395
    %v522 = vpack.c.b16 %v400, %v398
    %v523 = vpack.c.b16 %v401, %v399
    %v524 = vpack.c.b16 %v404, %v402
    %v525 = vpack.c.b16 %v405, %v403
    %v526 = vpack.c.b16 %v408, %v406
    %v527 = vpack.c.b16 %v409, %v407
    %v528 = vpack.c.b16 %v412, %v410
    %v529 = vpack.c.b16 %v413, %v411
    %v530 = vpack.c.b16 %v416, %v414
    %v531 = vpack.c.b16 %v417, %v415
    %v532 = vpack.c.b16 %v420, %v418
    %v533 = vpack.c.b16 %v421, %v419
    %v534 = vpack.c.b16 %v424, %v422
    %v535 = vpack.c.b16 %v425, %v423
    %v536 = vpack.c.b16 %v428, %v426
    %v537 = vpack.c.b16 %v429, %v427
    %v538 = vpack.c.b16 %v432, %v430
    %v539 = vpack.c.b16 %v433, %v431
    %v540 = vpack.c.b16 %v436, %v434
    %v541 = vpack.c.b16 %v437, %v435
    %v542 = vpack.c.b16 %v440, %v438
    %v543 = vpack.c.b16 %v441, %v439
    %v544 = vpack.c.b16 %v444, %v442
    %v545 = vpack.c.b16 %v445, %v443
    %v546 = vpack.c.b16 %v448, %v446
    %v547 = vpack.c.b16 %v449, %v447
    %vm646 = vcmask 130048
    %v648 = vsel %vm646, %v51, 0
    %650 = vmatpush.bf16.msra.mxu0 %v464
    %651 = vmatpush.bf16.msra.mxu0 %v462
    %652 = vmatpush.bf16.msra.mxu0 %v460
    %653 = vmatpush.bf16.msra.mxu0 %v458
    %654 = vmatpush.bf16.msra.mxu0 %v456
    %655 = vmatpush.bf16.msra.mxu0 %v454
    %656 = vmatpush.bf16.msra.mxu0 %v452
    %657 = vmatpush.bf16.msra.mxu0 %v450
    %658 = vmatmul.bf16.gmra.mxu0 %v45
    %v659 = vpop.f32.mrf.mxu0
    %v660 = vadd.f32 %v152, %v659
    %v661 = vpop.f32.mrf.mxu0
    %662 = vdwg.mxu0
    %663 = vmatpush.bf16.msra.mxu0 %v480
    %664 = vmatpush.bf16.msra.mxu0 %v478
    %665 = vmatpush.bf16.msra.mxu0 %v476
    %666 = vmatpush.bf16.msra.mxu0 %v474
    %667 = vmatpush.bf16.msra.mxu0 %v472
    %668 = vmatpush.bf16.msra.mxu0 %v470
    %669 = vmatpush.bf16.msra.mxu0 %v468
    %670 = vmatpush.bf16.msra.mxu0 %v466
    %671 = vmatmul.bf16.gmra.mxu0 %v46
    %v672 = vpop.f32.mrf.mxu0
    %v673 = vadd.f32 %v660, %v672
    %v674 = vpop.f32.mrf.mxu0
    %675 = vdwg.mxu0
    %676 = vmatpush.bf16.msra.mxu0 %v496
    %677 = vmatpush.bf16.msra.mxu0 %v494
    %678 = vmatpush.bf16.msra.mxu0 %v492
    %679 = vmatpush.bf16.msra.mxu0 %v490
    %680 = vmatpush.bf16.msra.mxu0 %v488
    %681 = vmatpush.bf16.msra.mxu0 %v486
    %682 = vmatpush.bf16.msra.mxu0 %v484
    %683 = vmatpush.bf16.msra.mxu0 %v482
    %684 = vmatmul.bf16.gmra.mxu0 %v47
    %v685 = vpop.f32.mrf.mxu0
    %v686 = vadd.f32 %v673, %v685
    %v687 = vpop.f32.mrf.mxu0
    %688 = vdwg.mxu0
    %689 = vmatpush.bf16.msra.mxu0 %v512
    %690 = vmatpush.bf16.msra.mxu0 %v510
    %691 = vmatpush.bf16.msra.mxu0 %v508
    %692 = vmatpush.bf16.msra.mxu0 %v506
    %693 = vmatpush.bf16.msra.mxu0 %v504
    %694 = vmatpush.bf16.msra.mxu0 %v502
    %695 = vmatpush.bf16.msra.mxu0 %v500
    %696 = vmatpush.bf16.msra.mxu0 %v498
    %697 = vmatmul.bf16.gmra.mxu0 %v48
    %v698 = vpop.f32.mrf.mxu0
    %v699 = vadd.f32 %v686, %v698
    %v700 = vpop.f32.mrf.mxu0
    %701 = vdwg.mxu0
    %702 = vmatpush.bf16.msra.mxu0 %v528
    %703 = vmatpush.bf16.msra.mxu0 %v526
    %704 = vmatpush.bf16.msra.mxu0 %v524
    %705 = vmatpush.bf16.msra.mxu0 %v522
    %706 = vmatpush.bf16.msra.mxu0 %v520
    %707 = vmatpush.bf16.msra.mxu0 %v518
    %708 = vmatpush.bf16.msra.mxu0 %v516
    %709 = vmatpush.bf16.msra.mxu0 %v514
    %710 = vmatmul.bf16.gmra.mxu0 %v49
    %v711 = vpop.f32.mrf.mxu0
    %v712 = vadd.f32 %v699, %v711
    %v713 = vpop.f32.mrf.mxu0
    %714 = vdwg.mxu0
    %715 = vmatpush.bf16.msra.mxu0 %v544
    %716 = vmatpush.bf16.msra.mxu0 %v542
    %717 = vmatpush.bf16.msra.mxu0 %v540
    %718 = vmatpush.bf16.msra.mxu0 %v538
    %719 = vmatpush.bf16.msra.mxu0 %v536
    %720 = vmatpush.bf16.msra.mxu0 %v534
    %721 = vmatpush.bf16.msra.mxu0 %v532
    %722 = vmatpush.bf16.msra.mxu0 %v530
    %723 = vmatmul.bf16.gmra.mxu0 %v50
    %v724 = vpop.f32.mrf.mxu0
    %v725 = vadd.f32 %v712, %v724
    %v726 = vpop.f32.mrf.mxu0
    %727 = vdwg.mxu0
    %728 = vmatpush.bf16.msra.mxu0 0
    %729 = vmatpush.bf16.msra.mxu0 0
    %730 = vmatpush.bf16.msra.mxu0 0
    %731 = vmatpush.bf16.msra.mxu0 0
    %732 = vmatpush.bf16.msra.mxu0 0
    %733 = vmatpush.bf16.msra.mxu0 0
    %734 = vmatpush.bf16.msra.mxu0 0
    %735 = vmatpush.bf16.msra.mxu0 %v546
    %736 = vmatmul.bf16.gmra.mxu0 %v648
    %v737 = vpop.f32.mrf.mxu0
    %v738 = vadd.f32 %v725, %v737
    %v739 = vpop.f32.mrf.mxu0
    %740 = vdwg.mxu0
    %741 = vmatpush.bf16.msra.mxu0 %v465
    %742 = vmatpush.bf16.msra.mxu0 %v463
    %743 = vmatpush.bf16.msra.mxu0 %v461
    %744 = vmatpush.bf16.msra.mxu0 %v459
    %745 = vmatpush.bf16.msra.mxu0 %v457
    %746 = vmatpush.bf16.msra.mxu0 %v455
    %747 = vmatpush.bf16.msra.mxu0 %v453
    %748 = vmatpush.bf16.msra.mxu0 %v451
    %749 = vmatmul.bf16.gmra.mxu0 %v45
    %v750 = vpop.f32.mrf.mxu0
    %v751 = vadd.f32 %v153, %v750
    %v752 = vpop.f32.mrf.mxu0
    %753 = vdwg.mxu0
    %754 = vmatpush.bf16.msra.mxu0 %v481
    %755 = vmatpush.bf16.msra.mxu0 %v479
    %756 = vmatpush.bf16.msra.mxu0 %v477
    %757 = vmatpush.bf16.msra.mxu0 %v475
    %758 = vmatpush.bf16.msra.mxu0 %v473
    %759 = vmatpush.bf16.msra.mxu0 %v471
    %760 = vmatpush.bf16.msra.mxu0 %v469
    %761 = vmatpush.bf16.msra.mxu0 %v467
    %762 = vmatmul.bf16.gmra.mxu0 %v46
    %v763 = vpop.f32.mrf.mxu0
    %v764 = vadd.f32 %v751, %v763
    %v765 = vpop.f32.mrf.mxu0
    %766 = vdwg.mxu0
    %767 = vmatpush.bf16.msra.mxu0 %v497
    %768 = vmatpush.bf16.msra.mxu0 %v495
    %769 = vmatpush.bf16.msra.mxu0 %v493
    %770 = vmatpush.bf16.msra.mxu0 %v491
    %771 = vmatpush.bf16.msra.mxu0 %v489
    %772 = vmatpush.bf16.msra.mxu0 %v487
    %773 = vmatpush.bf16.msra.mxu0 %v485
    %774 = vmatpush.bf16.msra.mxu0 %v483
    %775 = vmatmul.bf16.gmra.mxu0 %v47
    %v776 = vpop.f32.mrf.mxu0
    %v777 = vadd.f32 %v764, %v776
    %v778 = vpop.f32.mrf.mxu0
    %779 = vdwg.mxu0
    %780 = vmatpush.bf16.msra.mxu0 %v513
    %781 = vmatpush.bf16.msra.mxu0 %v511
    %782 = vmatpush.bf16.msra.mxu0 %v509
    %783 = vmatpush.bf16.msra.mxu0 %v507
    %784 = vmatpush.bf16.msra.mxu0 %v505
    %785 = vmatpush.bf16.msra.mxu0 %v503
    %786 = vmatpush.bf16.msra.mxu0 %v501
    %787 = vmatpush.bf16.msra.mxu0 %v499
    %788 = vmatmul.bf16.gmra.mxu0 %v48
    %v789 = vpop.f32.mrf.mxu0
    %v790 = vadd.f32 %v777, %v789
    %v791 = vpop.f32.mrf.mxu0
    %792 = vdwg.mxu0
    %793 = vmatpush.bf16.msra.mxu0 %v529
    %794 = vmatpush.bf16.msra.mxu0 %v527
    %795 = vmatpush.bf16.msra.mxu0 %v525
    %796 = vmatpush.bf16.msra.mxu0 %v523
    %797 = vmatpush.bf16.msra.mxu0 %v521
    %798 = vmatpush.bf16.msra.mxu0 %v519
    %799 = vmatpush.bf16.msra.mxu0 %v517
    %800 = vmatpush.bf16.msra.mxu0 %v515
    %801 = vmatmul.bf16.gmra.mxu0 %v49
    %v802 = vpop.f32.mrf.mxu0
    %v803 = vadd.f32 %v790, %v802
    %v804 = vpop.f32.mrf.mxu0
    %805 = vdwg.mxu0
    %806 = vmatpush.bf16.msra.mxu0 %v545
    %807 = vmatpush.bf16.msra.mxu0 %v543
    %808 = vmatpush.bf16.msra.mxu0 %v541
    %809 = vmatpush.bf16.msra.mxu0 %v539
    %810 = vmatpush.bf16.msra.mxu0 %v537
    %811 = vmatpush.bf16.msra.mxu0 %v535
    %812 = vmatpush.bf16.msra.mxu0 %v533
    %813 = vmatpush.bf16.msra.mxu0 %v531
    %814 = vmatmul.bf16.gmra.mxu0 %v50
    %v815 = vpop.f32.mrf.mxu0
    %v816 = vadd.f32 %v803, %v815
    %v817 = vpop.f32.mrf.mxu0
    %818 = vdwg.mxu0
    %819 = vmatpush.bf16.msra.mxu0 0
    %820 = vmatpush.bf16.msra.mxu0 0
    %821 = vmatpush.bf16.msra.mxu0 0
    %822 = vmatpush.bf16.msra.mxu0 0
    %823 = vmatpush.bf16.msra.mxu0 0
    %824 = vmatpush.bf16.msra.mxu0 0
    %825 = vmatpush.bf16.msra.mxu0 0
    %826 = vmatpush.bf16.msra.mxu0 %v547
    %827 = vmatmul.bf16.gmra.mxu0 %v648
    %v828 = vpop.f32.mrf.mxu0
    %v829 = vadd.f32 %v816, %v828
    %v830 = vpop.f32.mrf.mxu0
    %831 = vdwg.mxu0
    %v832 = vmax.f32 %v738, 0.0
    %v833 = vmax.f32 %v829, 0.0
    %v834 = vpack.c.bf16 %v832, %v832
    %v835 = vpack.c.bf16 %v833, %v833
    %v836 = vld [vmem:[#allocation2] sm:$0xf]
    %v837 = vld [vmem:[#allocation2 + $0x4] sm:$0xf]
    %v838 = vld [vmem:[#allocation2 + $0x8] sm:$0xf]
    %v839 = vld [vmem:[#allocation2 + $0xc] sm:$0xf]
    %v840 = vld [vmem:[#allocation2 + $0x10] sm:$0xf]
    %v841 = vld [vmem:[#allocation2 + $0x14] sm:$0xf]
    %v842 = vld [vmem:[#allocation2 + $0x18] sm:$0xf]
    %v843 = vld [vmem:[#allocation2 + $0x1c] sm:$0xf]
    %v844 = vld [vmem:[#allocation2 + $0x20] sm:$0xf]
    %v845 = vld [vmem:[#allocation2 + $0x24] sm:$0xf]
    %v846 = vld [vmem:[#allocation2 + $0x28] sm:$0xf]
    %v847 = vld [vmem:[#allocation2 + $0x2c] sm:$0xf]
    %v848 = vld [vmem:[#allocation2 + $0x30] sm:$0xf]
    %v849 = vld [vmem:[#allocation2 + $0x34] sm:$0xf]
    %v850 = vld [vmem:[#allocation2 + $0x38] sm:$0xf]
    %v851 = vld [vmem:[#allocation2 + $0x3c] sm:$0xf]
    %v852 = vld [vmem:[#allocation2 + $0x40] sm:$0xf]
    %v853 = vld [vmem:[#allocation2 + $0x44] sm:$0xf]
    %v854 = vld [vmem:[#allocation2 + $0x48] sm:$0xf]
    %v855 = vld [vmem:[#allocation2 + $0x4c] sm:$0xf]
    %v856 = vld [vmem:[#allocation2 + $0x50] sm:$0xf]
    %v857 = vld [vmem:[#allocation2 + $0x54] sm:$0xf]
    %v858 = vld [vmem:[#allocation2 + $0x58] sm:$0xf]
    %v859 = vld [vmem:[#allocation2 + $0x5c] sm:$0xf]
    %v860 = vld [vmem:[#allocation2 + $0x60] sm:$0xf]
    %v861 = vld [vmem:[#allocation2 + $0x64] sm:$0xf]
    %v862 = vld [vmem:[#allocation2 + $0x68] sm:$0xf]
    %v863 = vld [vmem:[#allocation2 + $0x6c] sm:$0xf]
    %v864 = vld [vmem:[#allocation2 + $0x70] sm:$0xf]
    %v865 = vld [vmem:[#allocation2 + $0x74] sm:$0xf]
    %v866 = vld [vmem:[#allocation2 + $0x78] sm:$0xf]
    %v867 = vld [vmem:[#allocation2 + $0x7c] sm:$0xf]
    %v868 = vld [vmem:[%s4] sm:$0x1]
    %v870 = vperm.slane %v868, 0
    %v904 = vunpack.c.l.b16 %v836
    %v905 = vunpack.c.l.b16 %v837
    %v906 = vunpack.c.l.b16 %v838
    %v907 = vunpack.c.l.b16 %v839
    %v908 = vunpack.c.l.b16 %v840
    %v909 = vunpack.c.l.b16 %v841
    %v910 = vunpack.c.l.b16 %v842
    %v911 = vunpack.c.l.b16 %v843
    %v912 = vunpack.c.l.b16 %v844
    %v913 = vunpack.c.l.b16 %v845
    %v914 = vunpack.c.l.b16 %v846
    %v915 = vunpack.c.l.b16 %v847
    %v916 = vunpack.c.l.b16 %v848
    %v917 = vunpack.c.l.b16 %v849
    %v918 = vunpack.c.l.b16 %v850
    %v919 = vunpack.c.l.b16 %v851
    %v920 = vunpack.c.l.b16 %v852
    %v921 = vunpack.c.l.b16 %v853
    %v922 = vunpack.c.l.b16 %v854
    %v923 = vunpack.c.l.b16 %v855
    %v924 = vunpack.c.l.b16 %v856
    %v925 = vunpack.c.l.b16 %v857
    %v926 = vunpack.c.l.b16 %v858
    %v927 = vunpack.c.l.b16 %v859
    %v928 = vunpack.c.l.b16 %v860
    %v929 = vunpack.c.l.b16 %v861
    %v930 = vunpack.c.l.b16 %v862
    %v931 = vunpack.c.l.b16 %v863
    %v932 = vunpack.c.l.b16 %v864
    %v933 = vunpack.c.l.b16 %v865
    %v934 = vunpack.c.l.b16 %v866
    %v935 = vunpack.c.l.b16 %v867
    %v936 = vpack.c.b16 %v905, %v904
    %v937 = vpack.c.b16 %v907, %v906
    %v938 = vpack.c.b16 %v909, %v908
    %v939 = vpack.c.b16 %v911, %v910
    %v940 = vpack.c.b16 %v913, %v912
    %v941 = vpack.c.b16 %v915, %v914
    %v942 = vpack.c.b16 %v917, %v916
    %v943 = vpack.c.b16 %v919, %v918
    %v944 = vpack.c.b16 %v921, %v920
    %v945 = vpack.c.b16 %v923, %v922
    %v946 = vpack.c.b16 %v925, %v924
    %v947 = vpack.c.b16 %v927, %v926
    %v948 = vpack.c.b16 %v929, %v928
    %v949 = vpack.c.b16 %v931, %v930
    %v950 = vpack.c.b16 %v933, %v932
    %v951 = vpack.c.b16 %v935, %v934
    %968 = vmatpush.bf16.msra.mxu0 %v943
    %969 = vmatpush.bf16.msra.mxu0 %v942
    %970 = vmatpush.bf16.msra.mxu0 %v941
    %971 = vmatpush.bf16.msra.mxu0 %v940
    %972 = vmatpush.bf16.msra.mxu0 %v939
    %973 = vmatpush.bf16.msra.mxu0 %v938
    %974 = vmatpush.bf16.msra.mxu0 %v937
    %975 = vmatpush.bf16.msra.mxu0 %v936
    %976 = vmatmul.bf16.gmra.mxu0 %v834
    %v977 = vpop.f32.mrf.mxu0
    %v978 = vadd.f32 %v870, %v977
    %v979 = vpop.f32.mrf.mxu0
    %980 = vdwg.mxu0
    %981 = vmatpush.bf16.msra.mxu0 %v951
    %982 = vmatpush.bf16.msra.mxu0 %v950
    %983 = vmatpush.bf16.msra.mxu0 %v949
    %984 = vmatpush.bf16.msra.mxu0 %v948
    %985 = vmatpush.bf16.msra.mxu0 %v947
    %986 = vmatpush.bf16.msra.mxu0 %v946
    %987 = vmatpush.bf16.msra.mxu0 %v945
    %988 = vmatpush.bf16.msra.mxu0 %v944
    %989 = vmatmul.bf16.gmra.mxu0 %v835
    %v990 = vpop.f32.mrf.mxu0
    %v991 = vadd.f32 %v978, %v990
    %v992 = vpop.f32.mrf.mxu0
    %993 = vdwg.mxu0
    %994 = vmax.xlane.f32.xlu0 %v991
    %v995 = vpop.xlane.xlu0 %994
    %v996 = vsub.f32 %v991, %v995
    %v997 = vmul.f32 %v996, 1.442695
    %v998 = vpow.pop %v997
    %999 = vadd.xlane.f32.xlu0 %v998
    %v1000 = vpop.xlane.xlu0 %999
    %v1001 = vrcp.pop %v1000
    %v1002 = vmul.f32 %v1000, %v1001
    %v1003 = vsub.f32 1.0, %v1002
    %v1004 = vmul.f32 %v1001, %v1003
    %v1005 = vadd.f32 %v1001, %v1004
    %vm1006 = vweird.f32 %v1000
    %vm1007 = vweird.f32 %v1001
    %vm1008 = vmor %vm1006, %vm1007
    %v1009 = vsel %vm1008, %v1001, %v1005
    %v1010 = vand.u32 2147483647, %v1000
    %vm1011 = vcmp.eq.f32.partialorder %v1010, 8.507059e+37
    %v1012 = vand.u32 %v1000, 2147483648
    %v1013 = vor.u32 1.1754944e-38, %v1012
    %v1014 = vsel %vm1011, %v1013, %v1009
    %v1015 = vmul.f32 %v998, %v1014
    %1016 = vst [vmem:[#allocation5] sm:$0xff] %v1015
    // Predicated region
    $region26: #{feed_forward_net.1} parent=1 // pred_check
      _
    $region27: #{feed_forward_net.1} parent=1 // pred_check_branch
      %1018 = sbr.rel (0) target = $region29
    $region28: #{feed_forward_net.1} parent=1 // pred_region
      %1020 = vsyncadd [#allocation4], 0
      %s1022 = sshll.u32 [#allocation5], 4
      %s1023 = int_to_ptr.vmem [resolvable:$true] %s1022
      %s1024 = sshll.u32 %s5, 4
      %s1025 = int_to_ptr.hbm [resolvable:$true] %s1024
      %1027 = dma.vmem_to_hbm [thread:$0]  %s1023, 128, %s1025, [#allocation4]
    $region29: #{feed_forward_net.1} parent=1 // pred_fallthru
      _
    // Predicated region
    $region30: #{feed_forward_net.1} parent=1 // pred_check
      _
    $region31: #{feed_forward_net.1} parent=1 // pred_check_branch
      %1029 = sbr.rel (0) target = $region33
    $region32: #{feed_forward_net.1} parent=1 // pred_region
      %1031 = dma.done [#allocation4], 128
    $region33: #{feed_forward_net.1} parent=1 // pred_fallthru
      _
    %1032 = vsyncpa [#allocation3], 1
    %1033 = vsyncpa [#allocation4], 1

</llo_original>
